<compile_context>
chip_gen: v6e
topology: v6e:2x2x1
jax: 0.10.0
libtpu: 0.0.40
codegen_flags: <defaults>
</compile_context>

<pallas_src>
import functools

import jax
import jax.numpy as jnp
from jax import lax
from jax.experimental import pallas as pl
from jax.experimental.pallas import tpu as pltpu


def _round_up(n, m):
    return (n + m - 1) // m * m


def _conv_block_kernel(L, Lp, Cin_p, Cout_p, mask_bn,
                       x_ref, wa_ref, wb_ref, g1_ref, b1_ref, g2_ref, b2_ref,
                       out_ref, stk_ref):
    """Fused conv3 -> BN -> ReLU -> conv3 -> BN -> ReLU on a (C, N*Lp) slab."""
    NL = x_ref.shape[-1]
    n_valid = (NL // Lp) * L          # number of real (non-pad) positions

    # Boundary machinery built once and shared by both conv layers.
    pos = lax.broadcasted_iota(jnp.int32, (1, NL), 1) % Lp
    left_m = (pos >= 1).astype(jnp.float32)        # x[l-1] exists in sample
    right_m = (pos <= L - 2).astype(jnp.float32)   # x[l+1] exists in sample
    valid = (pos < L).astype(jnp.float32) if mask_bn else None

    def conv3(inp, w_ref, c):
        # Kernel-3 / pad-1 conv as ONE MXU matmul: the three shifted/masked
        # tap copies are written into the shared bf16 VMEM scratch (bounds
        # peak VMEM to one 3x copy, reused by both layers) and contracted
        # against the tap-major flattened bf16 weight.  f32 accumulation.
        stk_ref[pl.ds(0, c), :] = (
            pltpu.roll(inp, shift=1, axis=1) * left_m).astype(jnp.bfloat16)
        stk_ref[pl.ds(c, c), :] = inp.astype(jnp.bfloat16)
        stk_ref[pl.ds(2 * c, c), :] = (
            pltpu.roll(inp, shift=NL - 1, axis=1) * right_m).astype(jnp.bfloat16)
        # TODO(synk): on v7x (MRB in-place accumulation, 64 MiB VMEM) three
        # per-tap matmuls would avoid the 3x stacked copy entirely.
        return jnp.dot(w_ref[...], stk_ref[pl.ds(0, 3 * c), :],
                       preferred_element_type=jnp.float32)

    def bn_relu(y, g_ref, b_ref):
        # Training-mode BatchNorm1d folded into per-channel scale/shift:
        #   s = gamma * rsqrt(var + eps),  t = beta - mean * s
        #   out = max(y * s + t, 0)
        # One-pass stats (E[y^2]-E[y]^2) over real positions only; padded
        # lane positions are excluded via `valid`.
        inv_n = 1.0 / n_valid
        yv = y * valid if mask_bn else y
        mean = jnp.sum(yv, axis=-1, keepdims=True) * inv_n
        ex2 = jnp.sum(yv * yv, axis=-1, keepdims=True) * inv_n
        var = jnp.maximum(ex2 - mean * mean, 0.0)
        s = g_ref[...] * lax.rsqrt(var + 1e-5)
        t = b_ref[...] - mean * s
        return jnp.maximum(y * s + t, 0.0)

    y1 = bn_relu(conv3(x_ref[...], wa_ref, Cin_p), g1_ref, b1_ref)
    out_ref[...] = bn_relu(conv3(y1, wb_ref, Cout_p), g2_ref, b2_ref)


def conv_block_channel_major(x_cm, wa, wb, g1, b1, g2, b2, *, L):
    """Channel-major core: x_cm (C_in, N*L) -> (C_out, N*L).

    Chained encoder/decoder blocks should call this directly and keep the
    (C, N*L) layout between blocks; NCL transposes belong at model boundary.
    """
    Cin, NL = x_cm.shape
    N = NL // L
    Cout = wa.shape[0]
    # bf16 MXU operands: pad channels to 16 so bf16 sublane packing and the
    # MXU contraction dim stay aligned (padded channels carry zero weights /
    # gamma / beta and contribute nothing).
    Cin_p = _round_up(Cin, 16)
    Cout_p = _round_up(Cout, 16)
    # Lane-dense output: keep the last dim a multiple of 128.  If L is not,
    # pad each sample and exclude pad positions from BN statistics in-kernel.
    Lp = _round_up(L, 128)
    mask_bn = Lp != L
    NLp = N * Lp

    x32 = x_cm.astype(jnp.float32)
    if mask_bn:
        x32 = jnp.pad(x32.reshape(Cin, N, L), ((0, 0), (0, 0), (0, Lp - L)))
        x32 = x32.reshape(Cin, NLp)
    x_p = jnp.pad(x32, ((0, Cin_p - Cin), (0, 0)))

    # Tap-major flattening: column block k holds tap k's (C_out, C_in) slice,
    # matching the kernel's [x(l-1); x(l); x(l+1)] sublane stacking.  Cast to
    # bf16 for the MXU (f32 accumulation in-kernel).
    wa_p = jnp.pad(wa, ((0, Cout_p - Cout), (0, Cin_p - Cin), (0, 0)))
    wb_p = jnp.pad(wb, ((0, Cout_p - Cout), (0, Cout_p - Cout), (0, 0)))
    wa_f = jnp.transpose(wa_p, (0, 2, 1)).reshape(
        Cout_p, 3 * Cin_p).astype(jnp.bfloat16)
    wb_f = jnp.transpose(wb_p, (0, 2, 1)).reshape(
        Cout_p, 3 * Cout_p).astype(jnp.bfloat16)

    def padc(v):
        return jnp.pad(v.astype(jnp.float32),
                       (0, Cout_p - Cout)).reshape(Cout_p, 1)

    g1_p, b1_p, g2_p, b2_p = padc(g1), padc(b1), padc(g2), padc(b2)

    Cmax = max(Cin_p, Cout_p)
    kernel = functools.partial(_conv_block_kernel, L, Lp, Cin_p, Cout_p,
                               mask_bn)

    def full(shape):
        return pl.BlockSpec(shape, lambda i, _n=len(shape): (0,) * _n)

    # Explicit VMEM budget: double-buffered ins/outs + the shared stacked
    # scratch + intermediate-slab headroom; clamp to v7x's 64 MiB physical.
    vmem_bytes = (2 * (Cin_p * NLp * 4 + Cout_p * 3 * Cin_p * 2
                       + Cout_p * 3 * Cout_p * 2 + 4 * Cout_p * 4
                       + Cout_p * NLp * 4)
                  + 3 * Cmax * NLp * 2
                  + 2 * Cout_p * NLp * 4)
    vmem_limit = int(min(max(2 * vmem_bytes, 32 << 20), 64 << 20))

    out_p = pl.pallas_call(
        kernel,
        grid=(1,),
        in_specs=[
            full((Cin_p, NLp)),
            full((Cout_p, 3 * Cin_p)),
            full((Cout_p, 3 * Cout_p)),
            full((Cout_p, 1)), full((Cout_p, 1)),
            full((Cout_p, 1)), full((Cout_p, 1)),
        ],
        out_specs=full((Cout_p, NLp)),
        out_shape=jax.ShapeDtypeStruct((Cout_p, NLp), jnp.float32),
        scratch_shapes=[pltpu.VMEM((3 * Cmax, NLp), jnp.bfloat16)],
        compiler_params=pltpu.CompilerParams(
            dimension_semantics=("arbitrary",),
            vmem_limit_bytes=vmem_limit),
    )(x_p, wa_f, wb_f, g1_p, b1_p, g2_p, b2_p)

    out = out_p[:Cout]
    if mask_bn:
        out = out.reshape(Cout, N, Lp)[:, :, :L].reshape(Cout, N * L)
    return out


def conv_block_forward(x, wa, wb, g1, b1, g2, b2):
    """PyTorch-layout wrapper: x (N, C_in, L) f32 -> (N, C_out, L) f32."""
    N, Cin, L = x.shape
    Cout = wa.shape[0]
    x_cm = jnp.transpose(x, (1, 0, 2)).reshape(Cin, N * L)
    y_cm = conv_block_channel_major(x_cm, wa, wb, g1, b1, g2, b2, L=L)
    return jnp.transpose(y_cm.reshape(Cout, N, L), (1, 0, 2))


def log_derived_weight(w):
    """Conv1d_LoG weight smoothing (tiny parameter setup, plain JAX glue)."""
    cin = w.shape[1]
    k1 = jnp.array([1.0, 2.0, 1.0], jnp.float32) / 16.0
    k2 = jnp.array([-1.0, 8.0, -1.0], jnp.float32) / 16.0
    w1 = jnp.ones((cin, cin, 3), jnp.float32) * k1
    w2 = jnp.ones((cin, cin, 3), jnp.float32) * k2
    dn = ('NCH', 'OIH', 'NCH')
    cw1 = lax.conv_general_dilated(w, w1, (1,), ((1, 1),), dimension_numbers=dn)
    cw2 = lax.conv_general_dilated(cw1, w2, (1,), ((1, 1),), dimension_numbers=dn)
    return cw2


def _reference(x, wa, wb, g1, b1, g2, b2):
    """Pure-JAX f32-accurate reference for sanity checking."""
    def conv_ref(xx, w):
        return lax.conv_general_dilated(
            xx, w, (1,), ((1, 1),), dimension_numbers=('NCH', 'OIH', 'NCH'),
            precision=lax.Precision.HIGHEST)

    def bn_relu_ref(y, g, b):
        mean = y.mean(axis=(0, 2), keepdims=True)
        var = ((y - mean) ** 2).mean(axis=(0, 2), keepdims=True)
        yn = (y - mean) / jnp.sqrt(var + 1e-5)
        return jnp.maximum(yn * g[None, :, None] + b[None, :, None], 0.0)

    y1 = bn_relu_ref(conv_ref(x, wa), g1, b1)
    return bn_relu_ref(conv_ref(y1, wb), g2, b2)


def _run_case(key, N, in_c, out_c, L):
    kx, k1, k2 = jax.random.split(key, 3)
    x = jax.random.normal(kx, (N, in_c, L), jnp.float32)

    # Deterministic Conv1d weight init (kaiming-uniform-like bounds), bias=False.
    bound1 = 1.0 / (in_c * 3) ** 0.5
    w_conv1 = jax.random.uniform(k1, (out_c, in_c, 3), jnp.float32,
                                 -bound1, bound1)
    bound2 = 1.0 / (out_c * 3) ** 0.5
    w_conv2 = jax.random.uniform(k2, (out_c, out_c, 3), jnp.float32,
                                 -bound2, bound2)

    # Conv1d_RoG.forward only returns the LoG branch -> derive smoothed weights.
    wa = log_derived_weight(w_conv1)
    wb = log_derived_weight(w_conv2)

    # BatchNorm affine params at their nn.BatchNorm1d defaults.
    g1 = jnp.ones((out_c,), jnp.float32)
    b1 = jnp.zeros((out_c,), jnp.float32)
    g2 = jnp.ones((out_c,), jnp.float32)
    b2 = jnp.zeros((out_c,), jnp.float32)

    x_out = jax.jit(conv_block_forward)(x, wa, wb, g1, b1, g2, b2)
    jax.block_until_ready(x_out)

    y_ref = _reference(x, wa, wb, g1, b1, g2, b2)
    assert x_out.shape == (N, out_c, L)
    # Kernel matmuls run bf16 x bf16 -> f32 on the MXU; compare against the
    # f32-accurate reference with slack that covers bf16 rounding but still
    # catches any real shift/mask/BN bug (those produce O(0.1-1) errors).
    max_err = float(jnp.max(jnp.abs(x_out - y_ref)))
    assert jnp.allclose(x_out, y_ref, rtol=5e-2, atol=5e-2), max_err


if __name__ == "__main__":
    key = jax.random.PRNGKey(0)
    ka, kb = jax.random.split(key)
    # Lane-aligned fast path (L multiple of 128, no BN masking).
    _run_case(ka, N=2, in_c=4, out_c=8, L=128)
    # L-padding path: L -> 128, pad positions excluded from BN statistics.
    _run_case(kb, N=2, in_c=4, out_c=8, L=96)
    print("KERNEL_OK")
</pallas_src>

<mosaic_0001>
module attributes {stable_mosaic.version = 11 : i64} {
  func.func @_conv_block_kernel(%arg0: i32, %arg1: memref<16x256xf32, #tpu.memory_space<vmem>>, %arg2: memref<16x48xbf16, #tpu.memory_space<vmem>>, %arg3: memref<16x48xbf16, #tpu.memory_space<vmem>>, %arg4: memref<16x1xf32, #tpu.memory_space<vmem>>, %arg5: memref<16x1xf32, #tpu.memory_space<vmem>>, %arg6: memref<16x1xf32, #tpu.memory_space<vmem>>, %arg7: memref<16x1xf32, #tpu.memory_space<vmem>>, %arg8: memref<16x256xf32, #tpu.memory_space<vmem>>, %arg9: memref<48x256xbf16, #tpu.memory_space<vmem>>) attributes {dimension_semantics = [#tpu.dimension_semantics<arbitrary>], iteration_bounds = array<i64: 1>, scalar_prefetch = 0 : i64, scratch_operands = 1 : i64, tpu.core_type = #tpu.core_type<tc>, window_params = [{pipeline_mode = #tpu.pipeline_mode<synchronous>, transform_indices = @transform_0, window_bounds = array<i64: 16, 256>}, {pipeline_mode = #tpu.pipeline_mode<synchronous>, transform_indices = @transform_1, window_bounds = array<i64: 16, 48>}, {pipeline_mode = #tpu.pipeline_mode<synchronous>, transform_indices = @transform_2, window_bounds = array<i64: 16, 48>}, {pipeline_mode = #tpu.pipeline_mode<synchronous>, transform_indices = @transform_3, window_bounds = array<i64: 16, 1>}, {pipeline_mode = #tpu.pipeline_mode<synchronous>, transform_indices = @transform_4, window_bounds = array<i64: 16, 1>}, {pipeline_mode = #tpu.pipeline_mode<synchronous>, transform_indices = @transform_5, window_bounds = array<i64: 16, 1>}, {pipeline_mode = #tpu.pipeline_mode<synchronous>, transform_indices = @transform_6, window_bounds = array<i64: 16, 1>}, {pipeline_mode = #tpu.pipeline_mode<synchronous>, transform_indices = @transform_7, window_bounds = array<i64: 16, 256>}]} {
    %0 = tpu.iota {dimensions = array<i32: 1>} : vector<1x256xi32>
    %c128_i32 = arith.constant 128 : i32
    %c0_i32 = arith.constant 0 : i32
    %1 = arith.cmpi eq, %c128_i32, %c0_i32 : i32
    %c1_i32 = arith.constant 1 : i32
    %2 = arith.select %1, %c1_i32, %c128_i32 : i32
    %3 = vector.broadcast %2 : i32 to vector<1x256xi32>
    %4 = arith.remsi %0, %3 : vector<1x256xi32>
    %c0_i32_0 = arith.constant 0 : i32
    %5 = vector.broadcast %c0_i32_0 : i32 to vector<1x256xi32>
    %6 = arith.cmpi ne, %4, %5 : vector<1x256xi32>
    %c0_i32_1 = arith.constant 0 : i32
    %7 = vector.broadcast %c0_i32_1 : i32 to vector<1x256xi32>
    %8 = arith.cmpi slt, %4, %7 : vector<1x256xi32>
    %c0_i32_2 = arith.constant 0 : i32
    %9 = arith.cmpi slt, %2, %c0_i32_2 : i32
    %10 = vector.broadcast %9 : i1 to vector<1x256xi1>
    %11 = vector.broadcast %10 : vector<1x256xi1> to vector<1x256xi1>
    %12 = arith.xori %8, %11 : vector<1x256xi1>
    %13 = arith.andi %12, %6 : vector<1x256xi1>
    %14 = vector.broadcast %2 : i32 to vector<1x256xi32>
    %15 = arith.addi %4, %14 : vector<1x256xi32>
    %16 = arith.select %13, %15, %4 : vector<1x256xi1>, vector<1x256xi32>
    %c1_i32_3 = arith.constant 1 : i32
    %17 = vector.broadcast %c1_i32_3 : i32 to vector<1x256xi32>
    %18 = arith.cmpi sge, %16, %17 : vector<1x256xi32>
    %19 = arith.extui %18 : vector<1x256xi1> to vector<1x256xi32>
    %20 = arith.sitofp %19 : vector<1x256xi32> to vector<1x256xf32>
    %c126_i32 = arith.constant 126 : i32
    %21 = vector.broadcast %c126_i32 : i32 to vector<1x256xi32>
    %22 = arith.cmpi sle, %16, %21 : vector<1x256xi32>
    %23 = arith.extui %22 : vector<1x256xi1> to vector<1x256xi32>
    %24 = arith.sitofp %23 : vector<1x256xi32> to vector<1x256xf32>
    %c0 = arith.constant 0 : index
    %c0_4 = arith.constant 0 : index
    %25 = vector.load %arg1[%c0, %c0_4] : memref<16x256xf32, #tpu.memory_space<vmem>>, vector<16x256xf32>
    %c1_i32_5 = arith.constant 1 : i32
    %26 = tpu.dynamic_rotate %25 by %c1_i32_5 dim 1 : vector<16x256xf32>, i32 -> vector<16x256xf32>
    %27 = vector.broadcast %20 : vector<1x256xf32> to vector<16x256xf32>
    %28 = arith.mulf %26, %27 : vector<16x256xf32>
    %29 = arith.truncf %28 : vector<16x256xf32> to vector<16x256xbf16>
    %c0_6 = arith.constant 0 : index
    %c0_7 = arith.constant 0 : index
    %30 = vector.load %arg9[%c0_6, %c0_7] : memref<48x256xbf16, #tpu.memory_space<vmem>>, vector<16x256xbf16>
    tpu.vector_store %arg9[%c0_6, %c0_7], %29 {strides = array<i32>} : memref<48x256xbf16, #tpu.memory_space<vmem>>, vector<16x256xbf16>,
    %31 = arith.truncf %25 : vector<16x256xf32> to vector<16x256xbf16>
    %c16 = arith.constant 16 : index
    %c0_8 = arith.constant 0 : index
    %32 = vector.load %arg9[%c16, %c0_8] : memref<48x256xbf16, #tpu.memory_space<vmem>>, vector<16x256xbf16>
    tpu.vector_store %arg9[%c16, %c0_8], %31 {strides = array<i32>} : memref<48x256xbf16, #tpu.memory_space<vmem>>, vector<16x256xbf16>,
    %c255_i32 = arith.constant 255 : i32
    %33 = tpu.dynamic_rotate %25 by %c255_i32 dim 1 : vector<16x256xf32>, i32 -> vector<16x256xf32>
    %34 = vector.broadcast %24 : vector<1x256xf32> to vector<16x256xf32>
    %35 = arith.mulf %33, %34 : vector<16x256xf32>
    %36 = arith.truncf %35 : vector<16x256xf32> to vector<16x256xbf16>
    %c32 = arith.constant 32 : index
    %c0_9 = arith.constant 0 : index
    %37 = vector.load %arg9[%c32, %c0_9] : memref<48x256xbf16, #tpu.memory_space<vmem>>, vector<16x256xbf16>
    tpu.vector_store %arg9[%c32, %c0_9], %36 {strides = array<i32>} : memref<48x256xbf16, #tpu.memory_space<vmem>>, vector<16x256xbf16>,
    %c0_10 = arith.constant 0 : index
    %c0_11 = arith.constant 0 : index
    %38 = vector.load %arg2[%c0_10, %c0_11] : memref<16x48xbf16, #tpu.memory_space<vmem>>, vector<16x48xbf16>
    %c0_12 = arith.constant 0 : index
    %c0_13 = arith.constant 0 : index
    %39 = vector.load %arg9[%c0_12, %c0_13] : memref<48x256xbf16, #tpu.memory_space<vmem>>, vector<48x256xbf16>
    %cst = arith.constant dense<0.000000e+00> : vector<16x256xf32>
    %40 = tpu.matmul %38, %39, %cst {dimension_numbers = #tpu.dot_dimension_numbers<[1], [0], [0], [1], [0, 0, 1, 1], [], []>} : vector<16x48xbf16>, vector<48x256xbf16>, vector<16x256xf32> -> vector<16x256xf32>
    %cst_14 = arith.constant dense<0.000000e+00> : vector<16xf32>
    %41 = vector.multi_reduction <add>, %40, %cst_14 [1] : vector<16x256xf32> to vector<16xf32>
    %42 = vector.shape_cast %41 : vector<16xf32> to vector<16x1xf32>
    %cst_15 = arith.constant 3.906250e-03 : f32
    %43 = vector.broadcast %cst_15 : f32 to vector<16x1xf32>
    %44 = arith.mulf %42, %43 : vector<16x1xf32>
    %45 = arith.mulf %40, %40 : vector<16x256xf32>
    %cst_16 = arith.constant dense<0.000000e+00> : vector<16xf32>
    %46 = vector.multi_reduction <add>, %45, %cst_16 [1] : vector<16x256xf32> to vector<16xf32>
    %47 = vector.shape_cast %46 : vector<16xf32> to vector<16x1xf32>
    %cst_17 = arith.constant 3.906250e-03 : f32
    %48 = vector.broadcast %cst_17 : f32 to vector<16x1xf32>
    %49 = arith.mulf %47, %48 : vector<16x1xf32>
    %50 = arith.mulf %44, %44 : vector<16x1xf32>
    %51 = arith.subf %49, %50 : vector<16x1xf32>
    %cst_18 = arith.constant 0.000000e+00 : f32
    %52 = vector.broadcast %cst_18 : f32 to vector<16x1xf32>
    %53 = arith.maximumf %51, %52 : vector<16x1xf32>
    %c0_19 = arith.constant 0 : index
    %c0_20 = arith.constant 0 : index
    %54 = vector.load %arg4[%c0_19, %c0_20] : memref<16x1xf32, #tpu.memory_space<vmem>>, vector<16x1xf32>
    %cst_21 = arith.constant 9.99999974E-6 : f32
    %55 = vector.broadcast %cst_21 : f32 to vector<16x1xf32>
    %56 = arith.addf %53, %55 : vector<16x1xf32>
    %57 = math.rsqrt %56 : vector<16x1xf32>
    %58 = arith.mulf %54, %57 : vector<16x1xf32>
    %c0_22 = arith.constant 0 : index
    %c0_23 = arith.constant 0 : index
    %59 = vector.load %arg5[%c0_22, %c0_23] : memref<16x1xf32, #tpu.memory_space<vmem>>, vector<16x1xf32>
    %60 = arith.mulf %44, %58 : vector<16x1xf32>
    %61 = arith.subf %59, %60 : vector<16x1xf32>
    %62 = vector.broadcast %58 : vector<16x1xf32> to vector<16x256xf32>
    %63 = arith.mulf %40, %62 : vector<16x256xf32>
    %64 = vector.broadcast %61 : vector<16x1xf32> to vector<16x256xf32>
    %65 = arith.addf %63, %64 : vector<16x256xf32>
    %cst_24 = arith.constant 0.000000e+00 : f32
    %66 = vector.broadcast %cst_24 : f32 to vector<16x256xf32>
    %67 = arith.maximumf %65, %66 : vector<16x256xf32>
    %c1_i32_25 = arith.constant 1 : i32
    %68 = tpu.dynamic_rotate %67 by %c1_i32_25 dim 1 : vector<16x256xf32>, i32 -> vector<16x256xf32>
    %69 = vector.broadcast %20 : vector<1x256xf32> to vector<16x256xf32>
    %70 = arith.mulf %68, %69 : vector<16x256xf32>
    %71 = arith.truncf %70 : vector<16x256xf32> to vector<16x256xbf16>
    %c0_26 = arith.constant 0 : index
    %c0_27 = arith.constant 0 : index
    %72 = vector.load %arg9[%c0_26, %c0_27] : memref<48x256xbf16, #tpu.memory_space<vmem>>, vector<16x256xbf16>
    tpu.vector_store %arg9[%c0_26, %c0_27], %71 {strides = array<i32>} : memref<48x256xbf16, #tpu.memory_space<vmem>>, vector<16x256xbf16>,
    %73 = arith.truncf %67 : vector<16x256xf32> to vector<16x256xbf16>
    %c16_28 = arith.constant 16 : index
    %c0_29 = arith.constant 0 : index
    %74 = vector.load %arg9[%c16_28, %c0_29] : memref<48x256xbf16, #tpu.memory_space<vmem>>, vector<16x256xbf16>
    tpu.vector_store %arg9[%c16_28, %c0_29], %73 {strides = array<i32>} : memref<48x256xbf16, #tpu.memory_space<vmem>>, vector<16x256xbf16>,
    %c255_i32_30 = arith.constant 255 : i32
    %75 = tpu.dynamic_rotate %67 by %c255_i32_30 dim 1 : vector<16x256xf32>, i32 -> vector<16x256xf32>
    %76 = vector.broadcast %24 : vector<1x256xf32> to vector<16x256xf32>
    %77 = arith.mulf %75, %76 : vector<16x256xf32>
    %78 = arith.truncf %77 : vector<16x256xf32> to vector<16x256xbf16>
    %c32_31 = arith.constant 32 : index
    %c0_32 = arith.constant 0 : index
    %79 = vector.load %arg9[%c32_31, %c0_32] : memref<48x256xbf16, #tpu.memory_space<vmem>>, vector<16x256xbf16>
    tpu.vector_store %arg9[%c32_31, %c0_32], %78 {strides = array<i32>} : memref<48x256xbf16, #tpu.memory_space<vmem>>, vector<16x256xbf16>,
    %c0_33 = arith.constant 0 : index
    %c0_34 = arith.constant 0 : index
    %80 = vector.load %arg3[%c0_33, %c0_34] : memref<16x48xbf16, #tpu.memory_space<vmem>>, vector<16x48xbf16>
    %c0_35 = arith.constant 0 : index
    %c0_36 = arith.constant 0 : index
    %81 = vector.load %arg9[%c0_35, %c0_36] : memref<48x256xbf16, #tpu.memory_space<vmem>>, vector<48x256xbf16>
    %cst_37 = arith.constant dense<0.000000e+00> : vector<16x256xf32>
    %82 = tpu.matmul %80, %81, %cst_37 {dimension_numbers = #tpu.dot_dimension_numbers<[1], [0], [0], [1], [0, 0, 1, 1], [], []>} : vector<16x48xbf16>, vector<48x256xbf16>, vector<16x256xf32> -> vector<16x256xf32>
    %cst_38 = arith.constant dense<0.000000e+00> : vector<16xf32>
    %83 = vector.multi_reduction <add>, %82, %cst_38 [1] : vector<16x256xf32> to vector<16xf32>
    %84 = vector.shape_cast %83 : vector<16xf32> to vector<16x1xf32>
    %cst_39 = arith.constant 3.906250e-03 : f32
    %85 = vector.broadcast %cst_39 : f32 to vector<16x1xf32>
    %86 = arith.mulf %84, %85 : vector<16x1xf32>
    %87 = arith.mulf %82, %82 : vector<16x256xf32>
    %cst_40 = arith.constant dense<0.000000e+00> : vector<16xf32>
    %88 = vector.multi_reduction <add>, %87, %cst_40 [1] : vector<16x256xf32> to vector<16xf32>
    %89 = vector.shape_cast %88 : vector<16xf32> to vector<16x1xf32>
    %cst_41 = arith.constant 3.906250e-03 : f32
    %90 = vector.broadcast %cst_41 : f32 to vector<16x1xf32>
    %91 = arith.mulf %89, %90 : vector<16x1xf32>
    %92 = arith.mulf %86, %86 : vector<16x1xf32>
    %93 = arith.subf %91, %92 : vector<16x1xf32>
    %cst_42 = arith.constant 0.000000e+00 : f32
    %94 = vector.broadcast %cst_42 : f32 to vector<16x1xf32>
    %95 = arith.maximumf %93, %94 : vector<16x1xf32>
    %c0_43 = arith.constant 0 : index
    %c0_44 = arith.constant 0 : index
    %96 = vector.load %arg6[%c0_43, %c0_44] : memref<16x1xf32, #tpu.memory_space<vmem>>, vector<16x1xf32>
    %cst_45 = arith.constant 9.99999974E-6 : f32
    %97 = vector.broadcast %cst_45 : f32 to vector<16x1xf32>
    %98 = arith.addf %95, %97 : vector<16x1xf32>
    %99 = math.rsqrt %98 : vector<16x1xf32>
    %100 = arith.mulf %96, %99 : vector<16x1xf32>
    %c0_46 = arith.constant 0 : index
    %c0_47 = arith.constant 0 : index
    %101 = vector.load %arg7[%c0_46, %c0_47] : memref<16x1xf32, #tpu.memory_space<vmem>>, vector<16x1xf32>
    %102 = arith.mulf %86, %100 : vector<16x1xf32>
    %103 = arith.subf %101, %102 : vector<16x1xf32>
    %104 = vector.broadcast %100 : vector<16x1xf32> to vector<16x256xf32>
    %105 = arith.mulf %82, %104 : vector<16x256xf32>
    %106 = vector.broadcast %103 : vector<16x1xf32> to vector<16x256xf32>
    %107 = arith.addf %105, %106 : vector<16x256xf32>
    %cst_48 = arith.constant 0.000000e+00 : f32
    %108 = vector.broadcast %cst_48 : f32 to vector<16x256xf32>
    %109 = arith.maximumf %107, %108 : vector<16x256xf32>
    %c0_49 = arith.constant 0 : index
    %c0_50 = arith.constant 0 : index
    %110 = vector.load %arg8[%c0_49, %c0_50] : memref<16x256xf32, #tpu.memory_space<vmem>>, vector<16x256xf32>
    tpu.vector_store %arg8[%c0_49, %c0_50], %109 {strides = array<i32>} : memref<16x256xf32, #tpu.memory_space<vmem>>, vector<16x256xf32>,
    return
  }
  func.func @transform_0(%arg0: i32) -> (i32, i32) {
    %c0_i32 = arith.constant 0 : i32
    %c0_i32_0 = arith.constant 0 : i32
    %c0_i32_1 = arith.constant 0 : i32
    return %c0_i32, %c0_i32_0 : i32, i32
  }
  func.func @transform_1(%arg0: i32) -> (i32, i32) {
    %c0_i32 = arith.constant 0 : i32
    %c0_i32_0 = arith.constant 0 : i32
    %c0_i32_1 = arith.constant 0 : i32
    return %c0_i32, %c0_i32_0 : i32, i32
  }
  func.func @transform_2(%arg0: i32) -> (i32, i32) {
    %c0_i32 = arith.constant 0 : i32
    %c0_i32_0 = arith.constant 0 : i32
    %c0_i32_1 = arith.constant 0 : i32
    return %c0_i32, %c0_i32_0 : i32, i32
  }
  func.func @transform_3(%arg0: i32) -> (i32, i32) {
    %c0_i32 = arith.constant 0 : i32
    %c0_i32_0 = arith.constant 0 : i32
    %c0_i32_1 = arith.constant 0 : i32
    return %c0_i32, %c0_i32_0 : i32, i32
  }
  func.func @transform_4(%arg0: i32) -> (i32, i32) {
    %c0_i32 = arith.constant 0 : i32
    %c0_i32_0 = arith.constant 0 : i32
    %c0_i32_1 = arith.constant 0 : i32
    return %c0_i32, %c0_i32_0 : i32, i32
  }
  func.func @transform_5(%arg0: i32) -> (i32, i32) {
    %c0_i32 = arith.constant 0 : i32
    %c0_i32_0 = arith.constant 0 : i32
    %c0_i32_1 = arith.constant 0 : i32
    return %c0_i32, %c0_i32_0 : i32, i32
  }
  func.func @transform_6(%arg0: i32) -> (i32, i32) {
    %c0_i32 = arith.constant 0 : i32
    %c0_i32_0 = arith.constant 0 : i32
    %c0_i32_1 = arith.constant 0 : i32
    return %c0_i32, %c0_i32_0 : i32, i32
  }
  func.func @transform_7(%arg0: i32) -> (i32, i32) {
    %c0_i32 = arith.constant 0 : i32
    %c0_i32_0 = arith.constant 0 : i32
    %c0_i32_1 = arith.constant 0 : i32
    return %c0_i32, %c0_i32_0 : i32, i32
  }
}

</mosaic_0001>

<llo_original>
// kernel: conv_block_forward.1
$region0: #{conv_block_forward.1}
  #allocation0 [shape = 'u32[]', space=smem, size = 0x4, offset = 0x4, fixed_abs, tag = 'smem constant byte address 0x4 - core index']
  #allocation1 [shape = 'u32[144,128]{1,0:T(1,128)}', space=vmem, size = 0x12000, scoped, tag = 'internal scratch']
  #allocation2 [shape = 'bf16[48,256]{1,0:T(8,128)(2,1)}', space=vmem, size = 0x6000, scoped, tag = 'scratch operand']
  %s0 = inlined_call_operand.vmem [shape: f32[16,256], index: 0, kind: input, shape index: {}]
  %s1 = inlined_call_operand.vmem [shape: bf16[16,48], index: 1, kind: input, shape index: {}]
  %s2 = inlined_call_operand.vmem [shape: bf16[16,48], index: 2, kind: input, shape index: {}]
  %s3 = inlined_call_operand.vmem [shape: f32[16,1], index: 3, kind: input, shape index: {}]
  %s4 = inlined_call_operand.vmem [shape: f32[16,1], index: 4, kind: input, shape index: {}]
  %s5 = inlined_call_operand.vmem [shape: f32[16,1], index: 5, kind: input, shape index: {}]
  %s6 = inlined_call_operand.vmem [shape: f32[16,1], index: 6, kind: input, shape index: {}]
  %s7 = inlined_call_operand.vmem [shape: f32[16,256], index: 7, kind: output, shape index: {}]
  %s8 = sld [smem:[#allocation0]]
  $region38: #{conv_block_forward.1} parent=0
    _
  %s10 = ssub.s32 1, %s8
  %s11 = scalar_select 0, %s10, %s8
  // Predicated region
  $region2: #{conv_block_forward.1} parent=0 // pred_check
    _
  $region3: #{conv_block_forward.1} parent=0 // pred_check_branch
    %13 = sbr.rel (0) target = $region5
  $region4: #{conv_block_forward.1} parent=0 // pred_region
    _
  $region5: #{conv_block_forward.1} parent=0 // pred_fallthru
    _
  // Predicated region
  $region6: #{conv_block_forward.1} parent=0 // pred_check
    _
  $region7: #{conv_block_forward.1} parent=0 // pred_check_branch
    %15 = sbr.rel (0) target = $region9
  $region8: #{conv_block_forward.1} parent=0 // pred_region
    _
  $region9: #{conv_block_forward.1} parent=0 // pred_fallthru
    _
  // Predicated region
  $region10: #{conv_block_forward.1} parent=0 // pred_check
    _
  $region11: #{conv_block_forward.1} parent=0 // pred_check_branch
    %17 = sbr.rel (0) target = $region13
  $region12: #{conv_block_forward.1} parent=0 // pred_region
    _
  $region13: #{conv_block_forward.1} parent=0 // pred_fallthru
    _
  // Predicated region
  $region14: #{conv_block_forward.1} parent=0 // pred_check
    _
  $region15: #{conv_block_forward.1} parent=0 // pred_check_branch
    %19 = sbr.rel (0) target = $region17
  $region16: #{conv_block_forward.1} parent=0 // pred_region
    _
  $region17: #{conv_block_forward.1} parent=0 // pred_fallthru
    _
  // Predicated region
  $region18: #{conv_block_forward.1} parent=0 // pred_check
    _
  $region19: #{conv_block_forward.1} parent=0 // pred_check_branch
    %21 = sbr.rel (0) target = $region21
  $region20: #{conv_block_forward.1} parent=0 // pred_region
    _
  $region21: #{conv_block_forward.1} parent=0 // pred_fallthru
    _
  // Predicated region
  $region22: #{conv_block_forward.1} parent=0 // pred_check
    _
  $region23: #{conv_block_forward.1} parent=0 // pred_check_branch
    %23 = sbr.rel (0) target = $region25
  $region24: #{conv_block_forward.1} parent=0 // pred_region
    _
  $region25: #{conv_block_forward.1} parent=0 // pred_fallthru
    _
  // Predicated region
  $region26: #{conv_block_forward.1} parent=0 // pred_check
    _
  $region27: #{conv_block_forward.1} parent=0 // pred_check_branch
    %25 = sbr.rel (0) target = $region29
  $region28: #{conv_block_forward.1} parent=0 // pred_region
    _
  $region29: #{conv_block_forward.1} parent=0 // pred_fallthru
    _
  %v27 = vlaneseq
  %v28 = vand.u32 %v27, 127
  %v29 = vadd.s32 %v28, 128
  %vm30 = vcmp.lt.s32.totalorder %v28, 0
  %v31 = vsub.s32 0, %v28
  %v32 = vsel %vm30, %v31, %v28
  %v33 = vshrl.u32 %v32, 7
  %v34 = vand.u32 %v32, 127
  %v35 = vsub.s32 0, %v34
  %v36 = vsel %vm30, %v35, %v34
  %vm37 = vcmp.lt.s32.totalorder %v29, 0
  %v38 = vsub.s32 0, %v29
  %v39 = vsel %vm37, %v38, %v29
  %v40 = vshrl.u32 %v39, 7
  %v41 = vand.u32 %v39, 127
  %v42 = vsub.s32 0, %v41
  %v43 = vsel %vm37, %v42, %v41
  %vm44 = vcmp.ne.s32.totalorder %v36, 0
  %vm45 = vcmp.ne.s32.totalorder %v43, 0
  %vm46 = vcmp.lt.s32.totalorder %v36, 0
  %vm47 = vcmp.lt.s32.totalorder %v43, 0
  %vm48 = vmand %vm46, %vm44
  %vm49 = vmand %vm47, %vm45
  %v50 = vadd.s32 %v36, 128
  %v51 = vadd.s32 %v43, 128
  %v52 = vsel %vm48, %v50, %v36
  %v53 = vsel %vm49, %v51, %v43
  %vm54 = vcmp.ge.s32.totalorder %v52, 1
  %vm55 = vcmp.ge.s32.totalorder %v53, 1
  %v56 = vsel %vm54, 1, 0
  %v57 = vsel %vm55, 1, 0
  %v58 = vcvt.s32.f32 %v56
  %v59 = vcvt.s32.f32 %v57
  %vm60 = vcmp.le.s32.totalorder %v52, 126
  %vm61 = vcmp.le.s32.totalorder %v53, 126
  %v62 = vsel %vm60, 1, 0
  %v63 = vsel %vm61, 1, 0
  %v64 = vcvt.s32.f32 %v62
  %v65 = vcvt.s32.f32 %v63
  %v66 = vld [vmem:[%s0] sm:$0xff]
  %v67 = vld [vmem:[%s0 + $0x8] sm:$0xff]
  %v68 = vld [vmem:[%s0 + $0x10] sm:$0xff]
  %v69 = vld [vmem:[%s0 + $0x18] sm:$0xff]
  %70 = vrot.lane.b32.xlu0 %v66, 1
  %v71 = vpop.permute.xlu0 %70
  %72 = vrot.lane.b32.xlu0 %v68, 1
  %v73 = vpop.permute.xlu0 %72
  %74 = vrot.lane.b32.xlu0 %v67, 1
  %v75 = vpop.permute.xlu0 %74
  %76 = vrot.lane.b32.xlu0 %v69, 1
  %v77 = vpop.permute.xlu0 %76
  %vm78 = vcmp.lt.s32.totalorder %v28, 1
  %v79 = vsel %vm78, %v71, %v75
  %v80 = vsel %vm78, %v73, %v77
  %v81 = vsel %vm78, %v75, %v71
  %v82 = vsel %vm78, %v77, %v73
  %v83 = vmul.f32 %v81, %v58
  %v84 = vmul.f32 %v79, %v59
  %v85 = vmul.f32 %v82, %v58
  %v86 = vmul.f32 %v80, %v59
  %v87 = vpack.c.bf16 %v85, %v83
  %v88 = vpack.c.bf16 %v86, %v84
  %v91 = vunpack.c.l.b16 %v87
  %v92 = vunpack.c.l.b16 %v88
  %v93 = vunpack.c.h.b16 %v87
  %v94 = vunpack.c.h.b16 %v88
  %v95 = vpack.c.b16 %v92, %v91
  %v96 = vpack.c.b16 %v94, %v93
  %99 = vst [vmem:[#allocation2] sm:$0xff] %v95
  %100 = vst [vmem:[#allocation2 + $0x8] sm:$0xff] %v96
  %v101 = vpack.c.bf16 %v68, %v66
  %v102 = vpack.c.bf16 %v69, %v67
  %v105 = vunpack.c.l.b16 %v101
  %v106 = vunpack.c.l.b16 %v102
  %v107 = vunpack.c.h.b16 %v101
  %v108 = vunpack.c.h.b16 %v102
  %v109 = vpack.c.b16 %v106, %v105
  %v110 = vpack.c.b16 %v108, %v107
  %113 = vst [vmem:[#allocation2 + $0x10] sm:$0xff] %v109
  %114 = vst [vmem:[#allocation2 + $0x18] sm:$0xff] %v110
  %115 = vrot.lane.b32.xlu0 %v66, 127
  %v116 = vpop.permute.xlu0 %115
  %117 = vrot.lane.b32.xlu0 %v68, 127
  %v118 = vpop.permute.xlu0 %117
  %119 = vrot.lane.b32.xlu0 %v67, 127
  %v120 = vpop.permute.xlu0 %119
  %121 = vrot.lane.b32.xlu0 %v69, 127
  %v122 = vpop.permute.xlu0 %121
  %vm123 = vcmp.lt.s32.totalorder %v28, 127
  %v124 = vsel %vm123, %v116, %v120
  %v125 = vsel %vm123, %v118, %v122
  %v126 = vsel %vm123, %v120, %v116
  %v127 = vsel %vm123, %v122, %v118
  %v128 = vmul.f32 %v124, %v64
  %v129 = vmul.f32 %v126, %v65
  %v130 = vmul.f32 %v125, %v64
  %v131 = vmul.f32 %v127, %v65
  %v132 = vpack.c.bf16 %v130, %v128
  %v133 = vpack.c.bf16 %v131, %v129
  %v136 = vunpack.c.l.b16 %v132
  %v137 = vunpack.c.l.b16 %v133
  %v138 = vunpack.c.h.b16 %v132
  %v139 = vunpack.c.h.b16 %v133
  %v140 = vpack.c.b16 %v137, %v136
  %v141 = vpack.c.b16 %v139, %v138
  %144 = vst [vmem:[#allocation2 + $0x20] sm:$0xff] %v140
  %145 = vst [vmem:[#allocation2 + $0x28] sm:$0xff] %v141
  %v146 = vld [vmem:[%s1] sm:$0xf]
  %v147 = vld [vmem:[%s1 + $0x4] sm:$0xf]
  %v148 = vld [vmem:[#allocation2] sm:$0xff]
  %v149 = vld [vmem:[#allocation2 + $0x8] sm:$0xff]
  %v150 = vld [vmem:[#allocation2 + $0x10] sm:$0xff]
  %v151 = vld [vmem:[#allocation2 + $0x18] sm:$0xff]
  %v152 = vld [vmem:[#allocation2 + $0x20] sm:$0xff]
  %v153 = vld [vmem:[#allocation2 + $0x28] sm:$0xff]
  %v156 = vunpack.c.l.b16 %v146
  %v157 = vunpack.c.l.b16 %v147
  %v158 = vpack.c.b16 %v157, %v156
  %v165 = vunpack.c.l.b16 %v148
  %v166 = vunpack.c.h.b16 %v148
  %v167 = vunpack.c.l.b16 %v149
  %v168 = vunpack.c.h.b16 %v149
  %v169 = vunpack.c.l.b16 %v150
  %v170 = vunpack.c.h.b16 %v150
  %v171 = vunpack.c.l.b16 %v151
  %v172 = vunpack.c.h.b16 %v151
  %v173 = vunpack.c.l.b16 %v152
  %v174 = vunpack.c.h.b16 %v152
  %v175 = vunpack.c.l.b16 %v153
  %v176 = vunpack.c.h.b16 %v153
  %v177 = vpack.c.b16 %v167, %v165
  %v178 = vpack.c.b16 %v168, %v166
  %v179 = vpack.c.b16 %v171, %v169
  %v180 = vpack.c.b16 %v172, %v170
  %v181 = vpack.c.b16 %v175, %v173
  %v182 = vpack.c.b16 %v176, %v174
  %vm189 = vcmask 392192
  %v191 = vsel %vm189, %v158, 0
  %193 = vmatprep.subr.bf16.mxu0 0
  %194 = vmatpush1.bf16.msra.mxu0 0
  %195 = vmatprep.subr.bf16.mxu0 0
  %196 = vmatpush1.bf16.msra.mxu0 0
  %197 = vmatprep.subr.bf16.mxu0 0
  %198 = vmatpush1.bf16.msra.mxu0 0
  %199 = vmatprep.subr.bf16.mxu0 0
  %200 = vmatpush1.bf16.msra.mxu0 0
  %201 = vmatprep.subr.bf16.mxu0 0
  %202 = vmatpush1.bf16.msra.mxu0 0
  %203 = vmatprep.subr.bf16.mxu0 %v182
  %204 = vmatpush1.bf16.msra.mxu0 %v181
  %205 = vmatprep.subr.bf16.mxu0 %v180
  %206 = vmatpush1.bf16.msra.mxu0 %v179
  %207 = vmatprep.subr.bf16.mxu0 %v178
  %208 = vmatpush1.bf16.msra.mxu0 %v177
  %209 = vmatprep.subr.bf16.mxu0 0
  %210 = vmatpush2.bf16.msra.mxu0 0
  %211 = vmatprep.subr.bf16.mxu0 0
  %212 = vmatpush2.bf16.msra.mxu0 0
  %213 = vmatprep.subr.bf16.mxu0 0
  %214 = vmatpush2.bf16.msra.mxu0 0
  %215 = vmatprep.subr.bf16.mxu0 0
  %216 = vmatpush2.bf16.msra.mxu0 0
  %217 = vmatprep.subr.bf16.mxu0 0
  %218 = vmatpush2.bf16.msra.mxu0 0
  %219 = vmatprep.subr.bf16.mxu0 0
  %220 = vmatpush2.bf16.msra.mxu0 0
  %221 = vmatprep.subr.bf16.mxu0 0
  %222 = vmatpush2.bf16.msra.mxu0 0
  %223 = vmatprep.subr.bf16.mxu0 0
  %224 = vmatpush2.bf16.msra.mxu0 0
  %225 = vmatprep.mubr.bf16.mxu0 0
  %226 = vmatmul.mubr.bf16.gmra.mxu0 %v191
  %v227 = vpop.f32.mrf.mxu0
  %v228 = vadd.f32 0.0, %v227
  %v229 = vpop.f32.mrf.mxu0
  %v230 = vadd.f32 0.0, %v229
  %v231 = vpop.f32.mrf.mxu0
  %v232 = vadd.f32 0.0, %v231
  %v233 = vpop.f32.mrf.mxu0
  %v234 = vadd.f32 0.0, %v233
  %235 = vdwg.mxu0
  %v236 = vadd.f32 %v228, %v230
  %237 = vadd.xlane.f32.xlu0 %v236
  %v238 = vpop.xlane.xlu0 %237
  %v239 = vadd.f32 %v232, %v234
  %240 = vadd.xlane.f32.xlu0 %v239
  %v241 = vpop.xlane.xlu0 %240
  %v242 = vmul.f32 %v238, 0.00390625
  %v243 = vmul.f32 %v241, 0.00390625
  %v244 = vmul.f32 %v228, %v228
  %v245 = vmul.f32 %v230, %v230
  %v246 = vmul.f32 %v232, %v232
  %v247 = vmul.f32 %v234, %v234
  %v248 = vadd.f32 %v244, %v245
  %249 = vadd.xlane.f32.xlu0 %v248
  %v250 = vpop.xlane.xlu0 %249
  %v251 = vadd.f32 %v246, %v247
  %252 = vadd.xlane.f32.xlu0 %v251
  %v253 = vpop.xlane.xlu0 %252
  %v254 = vmul.f32 %v250, 0.00390625
  %v255 = vmul.f32 %v253, 0.00390625
  %v256 = vmul.f32 %v242, %v242
  %v257 = vmul.f32 %v243, %v243
  %v258 = vsub.f32 %v254, %v256
  %v259 = vsub.f32 %v255, %v257
  %v260 = vmax.f32 %v258, 0.0
  %v261 = vmax.f32 %v259, 0.0
  %v262 = vld [vmem:[%s3] sm:$0xff]
  %v263 = vld [vmem:[%s3 + $0x8] sm:$0xff]
  %v264 = vadd.f32 %v260, 1e-05
  %v265 = vadd.f32 %v261, 1e-05
  %v266 = vrsqrt.pop %v264
  %v267 = vrsqrt.pop %v265
  %v268 = vmul.f32 %v262, %v266
  %v269 = vmul.f32 %v263, %v267
  %v270 = vld [vmem:[%s4] sm:$0xff]
  %v271 = vld [vmem:[%s4 + $0x8] sm:$0xff]
  %v272 = vmul.f32 %v242, %v268
  %v273 = vmul.f32 %v243, %v269
  %v274 = vsub.f32 %v270, %v272
  %v275 = vsub.f32 %v271, %v273
  %277 = vset.pattern.permute.xlu0 0
  %278 = vperm.xlu0 %277, %v268
  %v279 = vpop.permute.xlu0 %278
  %282 = vset.pattern.permute.xlu0 0
  %283 = vperm.xlu0 %282, %v269
  %v284 = vpop.permute.xlu0 %283
  %v286 = vmul.f32 %v228, %v279
  %v287 = vmul.f32 %v230, %v279
  %v288 = vmul.f32 %v232, %v284
  %v289 = vmul.f32 %v234, %v284
  %291 = vset.pattern.permute.xlu0 0
  %292 = vperm.xlu0 %291, %v274
  %v293 = vpop.permute.xlu0 %292
  %296 = vset.pattern.permute.xlu0 0
  %297 = vperm.xlu0 %296, %v275
  %v298 = vpop.permute.xlu0 %297
  %v300 = vadd.f32 %v286, %v293
  %v301 = vadd.f32 %v287, %v293
  %v302 = vadd.f32 %v288, %v298
  %v303 = vadd.f32 %v289, %v298
  %v304 = vmax.f32 %v300, 0.0
  %v305 = vmax.f32 %v301, 0.0
  %v306 = vmax.f32 %v302, 0.0
  %v307 = vmax.f32 %v303, 0.0
  %308 = vrot.lane.b32.xlu0 %v304, 1
  %v309 = vpop.permute.xlu0 %308
  %310 = vrot.lane.b32.xlu0 %v306, 1
  %v311 = vpop.permute.xlu0 %310
  %312 = vrot.lane.b32.xlu0 %v305, 1
  %v313 = vpop.permute.xlu0 %312
  %314 = vrot.lane.b32.xlu0 %v307, 1
  %v315 = vpop.permute.xlu0 %314
  %v316 = vsel %vm78, %v309, %v313
  %v317 = vsel %vm78, %v311, %v315
  %v318 = vsel %vm78, %v313, %v309
  %v319 = vsel %vm78, %v315, %v311
  %v320 = vmul.f32 %v318, %v58
  %v321 = vmul.f32 %v316, %v59
  %v322 = vmul.f32 %v319, %v58
  %v323 = vmul.f32 %v317, %v59
  %v324 = vpack.c.bf16 %v322, %v320
  %v325 = vpack.c.bf16 %v323, %v321
  %v328 = vunpack.c.l.b16 %v324
  %v329 = vunpack.c.l.b16 %v325
  %v330 = vunpack.c.h.b16 %v324
  %v331 = vunpack.c.h.b16 %v325
  %v332 = vpack.c.b16 %v329, %v328
  %v333 = vpack.c.b16 %v331, %v330
  %336 = vst [vmem:[#allocation2] sm:$0xff] %v332
  %337 = vst [vmem:[#allocation2 + $0x8] sm:$0xff] %v333
  %v338 = vpack.c.bf16 %v306, %v304
  %v339 = vpack.c.bf16 %v307, %v305
  %v342 = vunpack.c.l.b16 %v338
  %v343 = vunpack.c.l.b16 %v339
  %v344 = vunpack.c.h.b16 %v338
  %v345 = vunpack.c.h.b16 %v339
  %v346 = vpack.c.b16 %v343, %v342
  %v347 = vpack.c.b16 %v345, %v344
  %350 = vst [vmem:[#allocation2 + $0x10] sm:$0xff] %v346
  %351 = vst [vmem:[#allocation2 + $0x18] sm:$0xff] %v347
  %352 = vrot.lane.b32.xlu0 %v304, 127
  %v353 = vpop.permute.xlu0 %352
  %354 = vrot.lane.b32.xlu0 %v306, 127
  %v355 = vpop.permute.xlu0 %354
  %356 = vrot.lane.b32.xlu0 %v305, 127
  %v357 = vpop.permute.xlu0 %356
  %358 = vrot.lane.b32.xlu0 %v307, 127
  %v359 = vpop.permute.xlu0 %358
  %v360 = vsel %vm123, %v353, %v357
  %v361 = vsel %vm123, %v355, %v359
  %v362 = vsel %vm123, %v357, %v353
  %v363 = vsel %vm123, %v359, %v355
  %v364 = vmul.f32 %v360, %v64
  %v365 = vmul.f32 %v362, %v65
  %v366 = vmul.f32 %v361, %v64
  %v367 = vmul.f32 %v363, %v65
  %v368 = vpack.c.bf16 %v366, %v364
  %v369 = vpack.c.bf16 %v367, %v365
  %v372 = vunpack.c.l.b16 %v368
  %v373 = vunpack.c.l.b16 %v369
  %v374 = vunpack.c.h.b16 %v368
  %v375 = vunpack.c.h.b16 %v369
  %v376 = vpack.c.b16 %v373, %v372
  %v377 = vpack.c.b16 %v375, %v374
  %380 = vst [vmem:[#allocation2 + $0x20] sm:$0xff] %v376
  %381 = vst [vmem:[#allocation2 + $0x28] sm:$0xff] %v377
  %v382 = vld [vmem:[%s2] sm:$0xf]
  %v383 = vld [vmem:[%s2 + $0x4] sm:$0xf]
  %v384 = vld [vmem:[#allocation2] sm:$0xff]
  %v385 = vld [vmem:[#allocation2 + $0x8] sm:$0xff]
  %v386 = vld [vmem:[#allocation2 + $0x10] sm:$0xff]
  %v387 = vld [vmem:[#allocation2 + $0x18] sm:$0xff]
  %v388 = vld [vmem:[#allocation2 + $0x20] sm:$0xff]
  %v389 = vld [vmem:[#allocation2 + $0x28] sm:$0xff]
  %v392 = vunpack.c.l.b16 %v382
  %v393 = vunpack.c.l.b16 %v383
  %v394 = vpack.c.b16 %v393, %v392
  %v401 = vunpack.c.l.b16 %v384
  %v402 = vunpack.c.h.b16 %v384
  %v403 = vunpack.c.l.b16 %v385
  %v404 = vunpack.c.h.b16 %v385
  %v405 = vunpack.c.l.b16 %v386
  %v406 = vunpack.c.h.b16 %v386
  %v407 = vunpack.c.l.b16 %v387
  %v408 = vunpack.c.h.b16 %v387
  %v409 = vunpack.c.l.b16 %v388
  %v410 = vunpack.c.h.b16 %v388
  %v411 = vunpack.c.l.b16 %v389
  %v412 = vunpack.c.h.b16 %v389
  %v413 = vpack.c.b16 %v403, %v401
  %v414 = vpack.c.b16 %v404, %v402
  %v415 = vpack.c.b16 %v407, %v405
  %v416 = vpack.c.b16 %v408, %v406
  %v417 = vpack.c.b16 %v411, %v409
  %v418 = vpack.c.b16 %v412, %v410
  %v426 = vsel %vm189, %v394, 0
  %428 = vmatprep.subr.bf16.mxu0 0
  %429 = vmatpush1.bf16.msra.mxu0 0
  %430 = vmatprep.subr.bf16.mxu0 0
  %431 = vmatpush1.bf16.msra.mxu0 0
  %432 = vmatprep.subr.bf16.mxu0 0
  %433 = vmatpush1.bf16.msra.mxu0 0
  %434 = vmatprep.subr.bf16.mxu0 0
  %435 = vmatpush1.bf16.msra.mxu0 0
  %436 = vmatprep.subr.bf16.mxu0 0
  %437 = vmatpush1.bf16.msra.mxu0 0
  %438 = vmatprep.subr.bf16.mxu0 %v418
  %439 = vmatpush1.bf16.msra.mxu0 %v417
  %440 = vmatprep.subr.bf16.mxu0 %v416
  %441 = vmatpush1.bf16.msra.mxu0 %v415
  %442 = vmatprep.subr.bf16.mxu0 %v414
  %443 = vmatpush1.bf16.msra.mxu0 %v413
  %444 = vmatprep.subr.bf16.mxu0 0
  %445 = vmatpush2.bf16.msra.mxu0 0
  %446 = vmatprep.subr.bf16.mxu0 0
  %447 = vmatpush2.bf16.msra.mxu0 0
  %448 = vmatprep.subr.bf16.mxu0 0
  %449 = vmatpush2.bf16.msra.mxu0 0
  %450 = vmatprep.subr.bf16.mxu0 0
  %451 = vmatpush2.bf16.msra.mxu0 0
  %452 = vmatprep.subr.bf16.mxu0 0
  %453 = vmatpush2.bf16.msra.mxu0 0
  %454 = vmatprep.subr.bf16.mxu0 0
  %455 = vmatpush2.bf16.msra.mxu0 0
  %456 = vmatprep.subr.bf16.mxu0 0
  %457 = vmatpush2.bf16.msra.mxu0 0
  %458 = vmatprep.subr.bf16.mxu0 0
  %459 = vmatpush2.bf16.msra.mxu0 0
  %460 = vmatprep.mubr.bf16.mxu0 0
  %461 = vmatmul.mubr.bf16.gmra.mxu0 %v426
  %v462 = vpop.f32.mrf.mxu0
  %v463 = vadd.f32 0.0, %v462
  %v464 = vpop.f32.mrf.mxu0
  %v465 = vadd.f32 0.0, %v464
  %v466 = vpop.f32.mrf.mxu0
  %v467 = vadd.f32 0.0, %v466
  %v468 = vpop.f32.mrf.mxu0
  %v469 = vadd.f32 0.0, %v468
  %470 = vdwg.mxu0
  %v471 = vadd.f32 %v463, %v465
  %472 = vadd.xlane.f32.xlu0 %v471
  %v473 = vpop.xlane.xlu0 %472
  %v474 = vadd.f32 %v467, %v469
  %475 = vadd.xlane.f32.xlu0 %v474
  %v476 = vpop.xlane.xlu0 %475
  %v477 = vmul.f32 %v473, 0.00390625
  %v478 = vmul.f32 %v476, 0.00390625
  %v479 = vmul.f32 %v463, %v463
  %v480 = vmul.f32 %v465, %v465
  %v481 = vmul.f32 %v467, %v467
  %v482 = vmul.f32 %v469, %v469
  %v483 = vadd.f32 %v479, %v480
  %484 = vadd.xlane.f32.xlu0 %v483
  %v485 = vpop.xlane.xlu0 %484
  %v486 = vadd.f32 %v481, %v482
  %487 = vadd.xlane.f32.xlu0 %v486
  %v488 = vpop.xlane.xlu0 %487
  %v489 = vmul.f32 %v485, 0.00390625
  %v490 = vmul.f32 %v488, 0.00390625
  %v491 = vmul.f32 %v477, %v477
  %v492 = vmul.f32 %v478, %v478
  %v493 = vsub.f32 %v489, %v491
  %v494 = vsub.f32 %v490, %v492
  %v495 = vmax.f32 %v493, 0.0
  %v496 = vmax.f32 %v494, 0.0
  %v497 = vld [vmem:[%s5] sm:$0xff]
  %v498 = vld [vmem:[%s5 + $0x8] sm:$0xff]
  %v499 = vadd.f32 %v495, 1e-05
  %v500 = vadd.f32 %v496, 1e-05
  %v501 = vrsqrt.pop %v499
  %v502 = vrsqrt.pop %v500
  %v503 = vmul.f32 %v497, %v501
  %v504 = vmul.f32 %v498, %v502
  %v505 = vld [vmem:[%s6] sm:$0xff]
  %v506 = vld [vmem:[%s6 + $0x8] sm:$0xff]
  %v507 = vmul.f32 %v477, %v503
  %v508 = vmul.f32 %v478, %v504
  %v509 = vsub.f32 %v505, %v507
  %v510 = vsub.f32 %v506, %v508
  %512 = vset.pattern.permute.xlu0 0
  %513 = vperm.xlu0 %512, %v503
  %v514 = vpop.permute.xlu0 %513
  %517 = vset.pattern.permute.xlu0 0
  %518 = vperm.xlu0 %517, %v504
  %v519 = vpop.permute.xlu0 %518
  %v521 = vmul.f32 %v463, %v514
  %v522 = vmul.f32 %v465, %v514
  %v523 = vmul.f32 %v467, %v519
  %v524 = vmul.f32 %v469, %v519
  %526 = vset.pattern.permute.xlu0 0
  %527 = vperm.xlu0 %526, %v509
  %v528 = vpop.permute.xlu0 %527
  %531 = vset.pattern.permute.xlu0 0
  %532 = vperm.xlu0 %531, %v510
  %v533 = vpop.permute.xlu0 %532
  %v535 = vadd.f32 %v521, %v528
  %v536 = vadd.f32 %v522, %v528
  %v537 = vadd.f32 %v523, %v533
  %v538 = vadd.f32 %v524, %v533
  %v539 = vmax.f32 %v535, 0.0
  %v540 = vmax.f32 %v536, 0.0
  %v541 = vmax.f32 %v537, 0.0
  %v542 = vmax.f32 %v538, 0.0
  %543 = vst [vmem:[%s7] sm:$0xff] %v539
  %544 = vst [vmem:[%s7 + $0x8] sm:$0xff] %v540
  %545 = vst [vmem:[%s7 + $0x10] sm:$0xff] %v541
  %546 = vst [vmem:[%s7 + $0x18] sm:$0xff] %v542
  // Predicated region
  $region30: #{conv_block_forward.1} parent=0 // pred_check
    _
  $region31: #{conv_block_forward.1} parent=0 // pred_check_branch
    %548 = sbr.rel (0) target = $region33
  $region32: #{conv_block_forward.1} parent=0 // pred_region
    _
  $region33: #{conv_block_forward.1} parent=0 // pred_fallthru
    _
  // Predicated region
  $region34: #{conv_block_forward.1} parent=0 // pred_check
    _
  $region35: #{conv_block_forward.1} parent=0 // pred_check_branch
    %550 = sbr.rel (0) target = $region37
  $region36: #{conv_block_forward.1} parent=0 // pred_region
    _
  $region37: #{conv_block_forward.1} parent=0 // pred_fallthru
    _

</llo_original>
